<compile_context>
chip_gen: v5e
topology: v5e:2x2
jax: 0.10.0
libtpu: 0.0.40
codegen_flags: <defaults>
</compile_context>

<pallas_src>
import functools
import math

import jax
import jax.numpy as jnp
from jax import lax
from jax.experimental import pallas as pl
from jax.experimental.pallas import tpu as pltpu


def _attn_kernel(x_ref, wqkv_ref, bqkv_ref, o_ref, *, num_heads, head_dim):
    Bb, S, C = x_ref.shape
    mm_dt = x_ref.dtype  # matmul input dtype (fp32, or bf16 if caller casts)

    # ---- fused QKV projection: one wide MXU matmul, fp32 accumulation ----
    x2d = x_ref[...].reshape(Bb * S, C)                         # (Bb*S, C)
    qkv = jnp.dot(x2d, wqkv_ref[...],
                  preferred_element_type=jnp.float32)           # (Bb*S, 3C)
    qkv = qkv + bqkv_ref[0]                                     # fp32 bias add

    # 1/sqrt(head_dim) is already folded into the Q weights/bias on the host.
    q = qkv[:, :C].astype(mm_dt).reshape(Bb, S, C)
    k = qkv[:, C:2 * C].astype(mm_dt).reshape(Bb, S, C)
    v = qkv[:, 2 * C:].astype(mm_dt).reshape(Bb, S, C)

    # ---- per-head attention (static unrolled loop; num_heads is small) ----
    # The per-head lane slices below are reads only; all head results are
    # concatenated once so the output is written with a single full-width,
    # lane-dense store (no per-head masked partial stores).
    head_out = []
    for h in range(num_heads):
        lo = h * head_dim
        qh = q[:, :, lo:lo + head_dim]                          # (Bb, S, D)
        kh = k[:, :, lo:lo + head_dim]
        vh = v[:, :, lo:lo + head_dim]

        # Batched scores without an explicit transpose: contract last dims.
        s = lax.dot_general(
            qh, kh,
            dimension_numbers=(((2,), (2,)), ((0,), (0,))),
            preferred_element_type=jnp.float32)                 # (Bb, S, S)

        # Numerically-stable softmax; normalization deferred to the (S, D)
        # output so the divide touches D columns instead of S.
        m = jnp.max(s, axis=-1, keepdims=True)
        p = jnp.exp(s - m)
        denom = jnp.sum(p, axis=-1, keepdims=True)              # (Bb, S, 1)

        pv = lax.dot_general(
            p.astype(mm_dt), vh,
            dimension_numbers=(((2,), (1,)), ((0,), (0,))),
            preferred_element_type=jnp.float32)                 # (Bb, S, D)

        inv = pl.reciprocal(denom, approx=True)                 # EUP slot
        head_out.append(pv * inv)

    out = head_out[0] if num_heads == 1 else jnp.concatenate(head_out, axis=-1)
    o_ref[...] = out.astype(o_ref.dtype)                        # one dense store


def _pick_batch_block(B, S, target_rows=256):
    """Largest divisor of B such that Bb*S <= target_rows (fills the MXU M
    dimension) without splitting tiny problems into extra grid steps."""
    divisors = [d for d in range(1, B + 1) if B % d == 0]
    cands = [d for d in divisors if d * S <= max(target_rows, S)]
    return max(cands) if cands else 1


def _derive_vmem_limit(Bb, S, C, io_itemsize, mm_itemsize):
    """Estimate scoped-VMEM need from block + intermediate sizes (+margin),
    clamped against the chip's physical VMEM minus headroom."""
    pad = lambda n, m: -(-n // m) * m
    Cp = pad(C, 128)
    Sp = pad(S, 8)
    C3p = pad(3 * C, 128)
    rows = Bb * Sp
    io_blocks = 2 * 2 * (Bb * Sp * Cp * io_itemsize)            # x + out, 2x buffered
    weights = 2 * (Cp * C3p * mm_itemsize + 8 * C3p * 4)        # Wqkv + bias, 2x buffered
    interm = (rows * C3p * 4                                    # fp32 qkv
              + 3 * rows * Cp * mm_itemsize                     # q/k/v casts
              + 2 * Bb * Sp * Sp * 4                            # scores + exp
              + 2 * rows * Cp * 4)                              # pv + concat out
    need = int((io_blocks + weights + interm) * 1.25) + (2 << 20)
    try:
        cap = int(getattr(pltpu.get_tpu_info(), "vmem_capacity_bytes", 64 << 20) * 3 // 4)
    except Exception:  # pragma: no cover - conservative fallback
        cap = 48 << 20
    return max(16 << 20, min(need, cap))


def fuse_attention_params(params, num_heads):
    """One-time (init-time) parameter prep: fuse Q/K/V into a single (C, 3C)
    weight / (1, 3C) bias and fold the 1/sqrt(head_dim) softmax scale into Q."""
    wq, bq, wk, bk, wv, bv = params      # wq/wk/wv pre-transposed (C_in, C_out)
    C = wq.shape[0]
    head_dim = C // num_heads
    scale = 1.0 / math.sqrt(head_dim)
    wqkv = jnp.concatenate([wq * scale, wk, wv], axis=1)        # (C, 3C)
    bqkv = jnp.concatenate([bq * scale, bk, bv], axis=1)        # (1, 3C)
    return wqkv, bqkv


def attention_module(x, wqkv, bqkv, *, num_heads, matmul_dtype=None):
    """Pallas equivalent of AttentionModule.forward (expects fused params)."""
    squeeze_seq = False
    if x.ndim == 2:                      # mirrors x.unsqueeze(1)
        x = x[:, None, :]
        squeeze_seq = True

    B, S, C = x.shape
    head_dim = C // num_heads
    out_dtype = x.dtype

    # Optional low-precision matmul path (recommended: jnp.bfloat16 on v5e,
    # whose MXU has no fp32 mode; accumulation stays fp32 either way).
    x_mm, w_mm = x, wqkv
    if matmul_dtype is not None:
        x_mm = x.astype(matmul_dtype)
        w_mm = wqkv.astype(matmul_dtype)
    b_f32 = bqkv.astype(jnp.float32)

    Bb = _pick_batch_block(B, S)
    kernel = functools.partial(_attn_kernel, num_heads=num_heads, head_dim=head_dim)

    cost = pl.CostEstimate(
        flops=int(2 * B * S * C * 3 * C + 4 * B * S * S * C),
        transcendentals=int(B * num_heads * S * S),
        bytes_accessed=int(2 * B * S * C * jnp.dtype(out_dtype).itemsize
                           + w_mm.size * jnp.dtype(w_mm.dtype).itemsize
                           + b_f32.size * 4),
    )

    out = pl.pallas_call(
        kernel,
        out_shape=jax.ShapeDtypeStruct((B, S, C), out_dtype),
        grid_spec=pltpu.PrefetchScalarGridSpec(
            num_scalar_prefetch=0,
            grid=(B // Bb,),
            in_specs=[
                pl.BlockSpec((Bb, S, C), lambda b: (b, 0, 0)),   # x: Bb batches/step
                # Constant index_map -> the weights/bias are not re-fetched
                # across grid steps.  For very large C, single-buffer these and
                # tile S flash-style to fit v7x's 64 MiB VMEM.
                pl.BlockSpec((C, 3 * C), lambda b: (0, 0)),      # fused Wqkv^T
                pl.BlockSpec((1, 3 * C), lambda b: (0, 0)),      # fused bias
            ],
            out_specs=pl.BlockSpec((Bb, S, C), lambda b: (b, 0, 0)),
        ),
        compiler_params=pltpu.CompilerParams(
            dimension_semantics=("parallel",),
            vmem_limit_bytes=_derive_vmem_limit(
                Bb, S, C,
                jnp.dtype(out_dtype).itemsize,
                jnp.dtype(x_mm.dtype).itemsize),
        ),
        cost_estimate=cost,
    )(x_mm, w_mm, b_f32)

    if squeeze_seq or S == 1:            # mirrors output.squeeze(1)
        out = out[:, 0, :]
    return out


# Jitted forward: keeps the (already init-time) param prep out of the per-call
# path and lets XLA cache/schedule around the pallas_call.
attention_forward = jax.jit(attention_module,
                            static_argnames=("num_heads", "matmul_dtype"))


def _reference(x, params, num_heads):
    """Pure-JAX reference identical to the PyTorch forward."""
    if x.ndim == 2:
        x = x[:, None, :]
    B, S, C = x.shape
    D = C // num_heads
    wq, bq, wk, bk, wv, bv = params
    q = (x @ wq + bq).reshape(B, S, num_heads, D).transpose(0, 2, 1, 3)
    k = (x @ wk + bk).reshape(B, S, num_heads, D).transpose(0, 2, 1, 3)
    v = (x @ wv + bv).reshape(B, S, num_heads, D).transpose(0, 2, 1, 3)
    s = jnp.einsum("bhqd,bhkd->bhqk", q, k) / math.sqrt(D)
    p = jax.nn.softmax(s, axis=-1)
    o = jnp.einsum("bhqk,bhkd->bhqd", p, v).transpose(0, 2, 1, 3).reshape(B, S, C)
    if S == 1:
        o = o[:, 0, :]
    return o


if __name__ == "__main__":
    # Small shapes consistent with the module: batch=4, seq=8, in_channels=32,
    # heads=2.  With target_rows=256 the batch block is Bb=4 -> grid=(1,).
    B, S, C = 4, 8, 32
    num_heads = 2

    key = jax.random.PRNGKey(0)
    kx, kq, kbq, kk, kbk, kv, kbv = jax.random.split(key, 7)

    bound = 1.0 / math.sqrt(C)  # nn.Linear-style uniform init, deterministic
    x = jax.random.normal(kx, (B, S, C), dtype=jnp.float32)
    wq = jax.random.uniform(kq, (C, C), jnp.float32, -bound, bound)   # W.T layout
    bq = jax.random.uniform(kbq, (1, C), jnp.float32, -bound, bound)
    wk = jax.random.uniform(kk, (C, C), jnp.float32, -bound, bound)
    bk = jax.random.uniform(kbk, (1, C), jnp.float32, -bound, bound)
    wv = jax.random.uniform(kv, (C, C), jnp.float32, -bound, bound)
    bv = jax.random.uniform(kbv, (1, C), jnp.float32, -bound, bound)

    params = (wq, bq, wk, bk, wv, bv)

    # Fuse/fold once at "parameter init" time (hoisted out of the forward).
    wqkv, bqkv = fuse_attention_params(params, num_heads)

    out = attention_forward(x, wqkv, bqkv, num_heads=num_heads)
    out = jax.block_until_ready(out)

    ref = _reference(x, params, num_heads)
    assert out.shape == ref.shape == (B, S, C)
    # Tolerance absorbs the EUP approximate reciprocal (~1e-3 relative) used
    # for the softmax normalization; any real bug would be far larger.
    assert jnp.allclose(out, ref, atol=1e-2, rtol=1e-2), "mismatch vs. reference"

    print("KERNEL_OK")
</pallas_src>

<mosaic_0001>
module attributes {stable_mosaic.version = 11 : i64} {
  func.func @_attn_kernel(%arg0: i32, %arg1: memref<4x8x32xf32, #tpu.memory_space<vmem>>, %arg2: memref<32x96xf32, #tpu.memory_space<vmem>>, %arg3: memref<1x96xf32, #tpu.memory_space<vmem>>, %arg4: memref<4x8x32xf32, #tpu.memory_space<vmem>>) attributes {dimension_semantics = [#tpu.dimension_semantics<parallel>], iteration_bounds = array<i64: 1>, scalar_prefetch = 0 : i64, scratch_operands = 0 : i64, tpu.core_type = #tpu.core_type<tc>, window_params = [{transform_indices = @transform_0, window_bounds = array<i64: 4, 8, 32>}, {pipeline_mode = #tpu.pipeline_mode<synchronous>, transform_indices = @transform_1, window_bounds = array<i64: 32, 96>}, {pipeline_mode = #tpu.pipeline_mode<synchronous>, transform_indices = @transform_2, window_bounds = array<i64: 1, 96>}, {transform_indices = @transform_3, window_bounds = array<i64: 4, 8, 32>}]} {
    %c0 = arith.constant 0 : index
    %c0_0 = arith.constant 0 : index
    %c0_1 = arith.constant 0 : index
    %0 = vector.load %arg1[%c0, %c0_0, %c0_1] : memref<4x8x32xf32, #tpu.memory_space<vmem>>, vector<4x8x32xf32>
    %1 = vector.shape_cast %0 : vector<4x8x32xf32> to vector<32x32xf32>
    %c0_2 = arith.constant 0 : index
    %c0_3 = arith.constant 0 : index
    %2 = vector.load %arg2[%c0_2, %c0_3] : memref<32x96xf32, #tpu.memory_space<vmem>>, vector<32x96xf32>
    %cst = arith.constant dense<0.000000e+00> : vector<32x96xf32>
    %3 = tpu.matmul %1, %2, %cst {dimension_numbers = #tpu.dot_dimension_numbers<[1], [0], [0], [1], [0, 0, 1, 1], [], []>} : vector<32x32xf32>, vector<32x96xf32>, vector<32x96xf32> -> vector<32x96xf32>
    %c0_4 = arith.constant 0 : index
    %c0_5 = arith.constant 0 : index
    %4 = vector.load %arg3[%c0_4, %c0_5] : memref<1x96xf32, #tpu.memory_space<vmem>>, vector<1x96xf32>
    %5 = vector.shape_cast %4 : vector<1x96xf32> to vector<96xf32>
    %6 = vector.shape_cast %5 : vector<96xf32> to vector<1x96xf32>
    %7 = vector.broadcast %6 : vector<1x96xf32> to vector<32x96xf32>
    %8 = arith.addf %3, %7 : vector<32x96xf32>
    %9 = vector.extract_strided_slice %8 {offsets = [0, 0], sizes = [32, 32], strides = [1, 1]} : vector<32x96xf32> to vector<32x32xf32>
    %10 = vector.shape_cast %9 : vector<32x32xf32> to vector<4x8x32xf32>
    %11 = vector.extract_strided_slice %8 {offsets = [0, 32], sizes = [32, 32], strides = [1, 1]} : vector<32x96xf32> to vector<32x32xf32>
    %12 = vector.shape_cast %11 : vector<32x32xf32> to vector<4x8x32xf32>
    %13 = vector.extract_strided_slice %8 {offsets = [0, 64], sizes = [32, 32], strides = [1, 1]} : vector<32x96xf32> to vector<32x32xf32>
    %14 = vector.shape_cast %13 : vector<32x32xf32> to vector<4x8x32xf32>
    %15 = vector.extract_strided_slice %10 {offsets = [0, 0, 0], sizes = [4, 8, 16], strides = [1, 1, 1]} : vector<4x8x32xf32> to vector<4x8x16xf32>
    %16 = vector.extract_strided_slice %12 {offsets = [0, 0, 0], sizes = [4, 8, 16], strides = [1, 1, 1]} : vector<4x8x32xf32> to vector<4x8x16xf32>
    %17 = vector.extract_strided_slice %14 {offsets = [0, 0, 0], sizes = [4, 8, 16], strides = [1, 1, 1]} : vector<4x8x32xf32> to vector<4x8x16xf32>
    %cst_6 = arith.constant dense<0.000000e+00> : vector<4x8x8xf32>
    %18 = tpu.matmul %15, %16, %cst_6 {dimension_numbers = #tpu.dot_dimension_numbers<[2], [2], [1], [1], [0, 0, 0, 1, 1, 1], [0], [0]>} : vector<4x8x16xf32>, vector<4x8x16xf32>, vector<4x8x8xf32> -> vector<4x8x8xf32>
    %cst_7 = arith.constant dense<0xFF800000> : vector<4x8xf32>
    %19 = vector.multi_reduction <maximumf>, %18, %cst_7 [2] : vector<4x8x8xf32> to vector<4x8xf32>
    %20 = vector.shape_cast %19 : vector<4x8xf32> to vector<4x8x1xf32>
    %21 = vector.broadcast %20 : vector<4x8x1xf32> to vector<4x8x8xf32>
    %22 = arith.subf %18, %21 : vector<4x8x8xf32>
    %23 = math.exp %22 : vector<4x8x8xf32>
    %cst_8 = arith.constant dense<0.000000e+00> : vector<4x8xf32>
    %24 = vector.multi_reduction <add>, %23, %cst_8 [2] : vector<4x8x8xf32> to vector<4x8xf32>
    %25 = vector.shape_cast %24 : vector<4x8xf32> to vector<4x8x1xf32>
    %cst_9 = arith.constant dense<0.000000e+00> : vector<4x8x16xf32>
    %26 = tpu.matmul %23, %17, %cst_9 {dimension_numbers = #tpu.dot_dimension_numbers<[2], [1], [1], [2], [0, 0, 0, 1, 1, 2], [0], [0]>} : vector<4x8x8xf32>, vector<4x8x16xf32>, vector<4x8x16xf32> -> vector<4x8x16xf32>
    %27 = tpu.reciprocal %25 {approx = true} : vector<4x8x1xf32> -> vector<4x8x1xf32>
    %28 = vector.broadcast %27 : vector<4x8x1xf32> to vector<4x8x16xf32>
    %29 = arith.mulf %26, %28 : vector<4x8x16xf32>
    %30 = vector.extract_strided_slice %10 {offsets = [0, 0, 16], sizes = [4, 8, 16], strides = [1, 1, 1]} : vector<4x8x32xf32> to vector<4x8x16xf32>
    %31 = vector.extract_strided_slice %12 {offsets = [0, 0, 16], sizes = [4, 8, 16], strides = [1, 1, 1]} : vector<4x8x32xf32> to vector<4x8x16xf32>
    %32 = vector.extract_strided_slice %14 {offsets = [0, 0, 16], sizes = [4, 8, 16], strides = [1, 1, 1]} : vector<4x8x32xf32> to vector<4x8x16xf32>
    %cst_10 = arith.constant dense<0.000000e+00> : vector<4x8x8xf32>
    %33 = tpu.matmul %30, %31, %cst_10 {dimension_numbers = #tpu.dot_dimension_numbers<[2], [2], [1], [1], [0, 0, 0, 1, 1, 1], [0], [0]>} : vector<4x8x16xf32>, vector<4x8x16xf32>, vector<4x8x8xf32> -> vector<4x8x8xf32>
    %cst_11 = arith.constant dense<0xFF800000> : vector<4x8xf32>
    %34 = vector.multi_reduction <maximumf>, %33, %cst_11 [2] : vector<4x8x8xf32> to vector<4x8xf32>
    %35 = vector.shape_cast %34 : vector<4x8xf32> to vector<4x8x1xf32>
    %36 = vector.broadcast %35 : vector<4x8x1xf32> to vector<4x8x8xf32>
    %37 = arith.subf %33, %36 : vector<4x8x8xf32>
    %38 = math.exp %37 : vector<4x8x8xf32>
    %cst_12 = arith.constant dense<0.000000e+00> : vector<4x8xf32>
    %39 = vector.multi_reduction <add>, %38, %cst_12 [2] : vector<4x8x8xf32> to vector<4x8xf32>
    %40 = vector.shape_cast %39 : vector<4x8xf32> to vector<4x8x1xf32>
    %cst_13 = arith.constant dense<0.000000e+00> : vector<4x8x16xf32>
    %41 = tpu.matmul %38, %32, %cst_13 {dimension_numbers = #tpu.dot_dimension_numbers<[2], [1], [1], [2], [0, 0, 0, 1, 1, 2], [0], [0]>} : vector<4x8x8xf32>, vector<4x8x16xf32>, vector<4x8x16xf32> -> vector<4x8x16xf32>
    %42 = tpu.reciprocal %40 {approx = true} : vector<4x8x1xf32> -> vector<4x8x1xf32>
    %43 = vector.broadcast %42 : vector<4x8x1xf32> to vector<4x8x16xf32>
    %44 = arith.mulf %41, %43 : vector<4x8x16xf32>
    %45 = tpu.concatenate %29, %44 in 2 : vector<4x8x16xf32>, vector<4x8x16xf32> -> vector<4x8x32xf32>
    %c0_14 = arith.constant 0 : index
    %c0_15 = arith.constant 0 : index
    %c0_16 = arith.constant 0 : index
    %46 = vector.load %arg4[%c0_14, %c0_15, %c0_16] : memref<4x8x32xf32, #tpu.memory_space<vmem>>, vector<4x8x32xf32>
    tpu.vector_store %arg4[%c0_14, %c0_15, %c0_16], %45 {strides = array<i32>} : memref<4x8x32xf32, #tpu.memory_space<vmem>>, vector<4x8x32xf32>,
    return
  }
  func.func @transform_0(%arg0: i32) -> (i32, i32, i32) {
    %c0_i32 = arith.constant 0 : i32
    %c0_i32_0 = arith.constant 0 : i32
    %c0_i32_1 = arith.constant 0 : i32
    return %arg0, %c0_i32, %c0_i32_0 : i32, i32, i32
  }
  func.func @transform_1(%arg0: i32) -> (i32, i32) {
    %c0_i32 = arith.constant 0 : i32
    %c0_i32_0 = arith.constant 0 : i32
    %c0_i32_1 = arith.constant 0 : i32
    return %c0_i32, %c0_i32_0 : i32, i32
  }
  func.func @transform_2(%arg0: i32) -> (i32, i32) {
    %c0_i32 = arith.constant 0 : i32
    %c0_i32_0 = arith.constant 0 : i32
    %c0_i32_1 = arith.constant 0 : i32
    return %c0_i32, %c0_i32_0 : i32, i32
  }
  func.func @transform_3(%arg0: i32) -> (i32, i32, i32) {
    %c0_i32 = arith.constant 0 : i32
    %c0_i32_0 = arith.constant 0 : i32
    %c0_i32_1 = arith.constant 0 : i32
    return %arg0, %c0_i32, %c0_i32_0 : i32, i32, i32
  }
}

</mosaic_0001>

<llo_original>
// kernel: attention_module.1
$region0: #{attention_module.1}
  #allocation0 [shape = 'u32[]', space=smem, size = 0x4, offset = 0x4, fixed_abs, tag = 'smem constant byte address 0x4 - core index']
  #allocation1 [shape = 'u32[72,128]{1,0:T(1,128)}', space=vmem, size = 0x9000, scoped, tag = 'internal scratch']
  %s0 = inlined_call_operand.hbm [shape: f32[4,8,32], index: 0, kind: input, shape index: {}]
  %s1 = inlined_call_operand.hbm [shape: f32[32,96], index: 1, kind: input, shape index: {}]
  %s2 = inlined_call_operand.vmem [shape: f32[1,96], index: 2, kind: input, shape index: {}]
  %s3 = inlined_call_operand.hbm [shape: f32[4,8,32], index: 3, kind: output, shape index: {}]
  %s4 = sld [smem:[#allocation0]]
  $region30: #{attention_module.1} parent=0
    _
  %s6 = ssub.s32 1, %s4
  %s7 = scalar_select 0, %s6, %s4
  $region1: #{attention_module.1} parent=0
    #allocation2 [shape = 'u8[16384]{0}', space=vmem, size = 0x4000, scoped, tag = 'input window, operand 0, single buffered']
    #allocation3 [shape = 's32[1]{0}', space=sflag, size = 0x4, scoped, tag = 'scoped memory for attention_module.1']
    #allocation4 [shape = 's32[1]{0}', space=sflag, size = 0x4, scoped, tag = 'scoped memory for attention_module.1']
    #allocation5 [shape = 'u8[16384]{0}', space=vmem, size = 0x4000, scoped, tag = 'input window, operand 1, single buffered']
    #allocation6 [shape = 's32[1]{0}', space=sflag, size = 0x4, scoped, tag = 'scoped memory for attention_module.1']
    #allocation7 [shape = 'u8[16384]{0}', space=vmem, size = 0x4000, scoped, tag = 'output window, operand 0, single buffered']
    %8 = vsyncpa [#allocation3], 0
    %9 = vsyncpa [#allocation6], 0
    %10 = vsyncpa [#allocation4], 0
    // Predicated region
    $region2: #{attention_module.1} parent=1 // pred_check
      _
    $region3: #{attention_module.1} parent=1 // pred_check_branch
      %12 = sbr.rel (0) target = $region5
    $region4: #{attention_module.1} parent=1 // pred_region
      %14 = vsyncadd [#allocation3], 0
      %s15 = sshll.u32 %s0, 4
      %s16 = int_to_ptr.hbm [resolvable:$true] %s15
      %s17 = sshll.u32 [#allocation2], 4
      %s18 = int_to_ptr.vmem [resolvable:$true] %s17
      %23 = dma.hbm_to_vmem [thread:$0]  %s16, 512, %s18, [#allocation3], 128, 128, 8
    $region5: #{attention_module.1} parent=1 // pred_fallthru
      _
    // Predicated region
    $region6: #{attention_module.1} parent=1 // pred_check
      _
    $region7: #{attention_module.1} parent=1 // pred_check_branch
      %25 = sbr.rel (0) target = $region9
    $region8: #{attention_module.1} parent=1 // pred_region
      %27 = vsyncadd [#allocation6], 0
      %s28 = sshll.u32 %s1, 4
      %s29 = int_to_ptr.hbm [resolvable:$true] %s28
      %s30 = sshll.u32 [#allocation5], 4
      %s31 = int_to_ptr.vmem [resolvable:$true] %s30
      %36 = dma.hbm_to_vmem [thread:$0]  %s29, 512, %s31, [#allocation6], 128, 128, 8
    $region9: #{attention_module.1} parent=1 // pred_fallthru
      _
    // Predicated region
    $region10: #{attention_module.1} parent=1 // pred_check
      _
    $region11: #{attention_module.1} parent=1 // pred_check_branch
      %38 = sbr.rel (0) target = $region13
    $region12: #{attention_module.1} parent=1 // pred_region
      _
    $region13: #{attention_module.1} parent=1 // pred_fallthru
      _
    // Predicated region
    $region14: #{attention_module.1} parent=1 // pred_check
      _
    $region15: #{attention_module.1} parent=1 // pred_check_branch
      %40 = sbr.rel (0) target = $region17
    $region16: #{attention_module.1} parent=1 // pred_region
      %42 = dma.done [#allocation3], 512
    $region17: #{attention_module.1} parent=1 // pred_fallthru
      _
    // Predicated region
    $region18: #{attention_module.1} parent=1 // pred_check
      _
    $region19: #{attention_module.1} parent=1 // pred_check_branch
      %44 = sbr.rel (0) target = $region21
    $region20: #{attention_module.1} parent=1 // pred_region
      %46 = dma.done [#allocation6], 512
    $region21: #{attention_module.1} parent=1 // pred_fallthru
      _
    %v47 = vld [vmem:[#allocation2] sm:$0xff]
    %v48 = vld [vmem:[#allocation2 + $0x8] sm:$0xff]
    %v49 = vld [vmem:[#allocation2 + $0x10] sm:$0xff]
    %v50 = vld [vmem:[#allocation2 + $0x18] sm:$0xff]
    %v51 = vld [vmem:[#allocation5] sm:$0xff]
    %v52 = vld [vmem:[#allocation5 + $0x8] sm:$0xff]
    %v53 = vld [vmem:[#allocation5 + $0x10] sm:$0xff]
    %v54 = vld [vmem:[#allocation5 + $0x18] sm:$0xff]
    %v55 = vld [vmem:[%s2] sm:$0x1]
    %v57 = vperm.slane %v55, 0
    %vm59 = vcmask 261120
    %v61 = vsel %vm59, %v47, 0
    %v64 = vsel %vm59, %v48, 0
    %v67 = vsel %vm59, %v49, 0
    %v70 = vsel %vm59, %v50, 0
    %72 = vmatpush.msra.mxu0 0.0
    %73 = vmatpush.msra.mxu0 0.0
    %74 = vmatpush.msra.mxu0 0.0
    %75 = vmatpush.msra.mxu0 0.0
    %76 = vmatpush.msra.mxu0 0.0
    %77 = vmatpush.msra.mxu0 0.0
    %78 = vmatpush.msra.mxu0 0.0
    %79 = vmatpush.msra.mxu0 0.0
    %80 = vmatpush.msra.mxu0 0.0
    %81 = vmatpush.msra.mxu0 0.0
    %82 = vmatpush.msra.mxu0 0.0
    %83 = vmatpush.msra.mxu0 0.0
    %84 = vmatpush.msra.mxu0 %v54
    %85 = vmatpush.msra.mxu0 %v53
    %86 = vmatpush.msra.mxu0 %v52
    %87 = vmatpush.msra.mxu0 %v51
    %88 = vmatmul.f32.gmra.mxu0 %v61
    %v89 = vpop.f32.mrf.mxu0
    %v90 = vadd.f32 %v57, %v89
    %91 = vmatmul.f32.gmra.mxu0 %v64
    %v92 = vpop.f32.mrf.mxu0
    %v93 = vadd.f32 %v57, %v92
    %94 = vmatmul.f32.gmra.mxu0 %v67
    %v95 = vpop.f32.mrf.mxu0
    %v96 = vadd.f32 %v57, %v95
    %97 = vmatmul.f32.gmra.mxu0 %v70
    %v98 = vpop.f32.mrf.mxu0
    %v99 = vadd.f32 %v57, %v98
    %100 = vdwg.mxu0
    %102 = vrot.lane.b32.xlu0 %v90, 96
    %v103 = vpop.permute.xlu0 %102
    %vm104 = vcmask 130048
    %v105 = vsel %vm104, %v90, 0
    %v107 = vsel %vm104, %v103, 0
    %109 = vmatpush.xpose.msra.mxu0 0.0
    %110 = vmatpush.xpose.msra.mxu0 0.0
    %111 = vmatpush.xpose.msra.mxu0 0.0
    %112 = vmatpush.xpose.msra.mxu0 0.0
    %113 = vmatpush.xpose.msra.mxu0 0.0
    %114 = vmatpush.xpose.msra.mxu0 0.0
    %115 = vmatpush.xpose.msra.mxu0 0.0
    %116 = vmatpush.xpose.msra.mxu0 0.0
    %117 = vmatpush.xpose.msra.mxu0 0.0
    %118 = vmatpush.xpose.msra.mxu0 0.0
    %119 = vmatpush.xpose.msra.mxu0 0.0
    %120 = vmatpush.xpose.msra.mxu0 0.0
    %121 = vmatpush.xpose.msra.mxu0 0.0
    %122 = vmatpush.xpose.msra.mxu0 0.0
    %123 = vmatpush.xpose.msra.mxu0 0.0
    %124 = vmatpush.xpose.msra.mxu0 %v107
    %125 = vmatmul.f32.gmra.mxu0 %v105
    %v126 = vpop.f32.mrf.mxu0
    %v127 = vadd.f32 0.0, %v126
    %128 = vdwg.mxu0
    %130 = vrot.lane.b32.xlu0 %v93, 96
    %v131 = vpop.permute.xlu0 %130
    %v132 = vsel %vm104, %v93, 0
    %v134 = vsel %vm104, %v131, 0
    %136 = vmatpush.xpose.msra.mxu0 0.0
    %137 = vmatpush.xpose.msra.mxu0 0.0
    %138 = vmatpush.xpose.msra.mxu0 0.0
    %139 = vmatpush.xpose.msra.mxu0 0.0
    %140 = vmatpush.xpose.msra.mxu0 0.0
    %141 = vmatpush.xpose.msra.mxu0 0.0
    %142 = vmatpush.xpose.msra.mxu0 0.0
    %143 = vmatpush.xpose.msra.mxu0 0.0
    %144 = vmatpush.xpose.msra.mxu0 0.0
    %145 = vmatpush.xpose.msra.mxu0 0.0
    %146 = vmatpush.xpose.msra.mxu0 0.0
    %147 = vmatpush.xpose.msra.mxu0 0.0
    %148 = vmatpush.xpose.msra.mxu0 0.0
    %149 = vmatpush.xpose.msra.mxu0 0.0
    %150 = vmatpush.xpose.msra.mxu0 0.0
    %151 = vmatpush.xpose.msra.mxu0 %v134
    %152 = vmatmul.f32.gmra.mxu0 %v132
    %v153 = vpop.f32.mrf.mxu0
    %v154 = vadd.f32 0.0, %v153
    %155 = vdwg.mxu0
    %157 = vrot.lane.b32.xlu0 %v96, 96
    %v158 = vpop.permute.xlu0 %157
    %v159 = vsel %vm104, %v96, 0
    %v161 = vsel %vm104, %v158, 0
    %163 = vmatpush.xpose.msra.mxu0 0.0
    %164 = vmatpush.xpose.msra.mxu0 0.0
    %165 = vmatpush.xpose.msra.mxu0 0.0
    %166 = vmatpush.xpose.msra.mxu0 0.0
    %167 = vmatpush.xpose.msra.mxu0 0.0
    %168 = vmatpush.xpose.msra.mxu0 0.0
    %169 = vmatpush.xpose.msra.mxu0 0.0
    %170 = vmatpush.xpose.msra.mxu0 0.0
    %171 = vmatpush.xpose.msra.mxu0 0.0
    %172 = vmatpush.xpose.msra.mxu0 0.0
    %173 = vmatpush.xpose.msra.mxu0 0.0
    %174 = vmatpush.xpose.msra.mxu0 0.0
    %175 = vmatpush.xpose.msra.mxu0 0.0
    %176 = vmatpush.xpose.msra.mxu0 0.0
    %177 = vmatpush.xpose.msra.mxu0 0.0
    %178 = vmatpush.xpose.msra.mxu0 %v161
    %179 = vmatmul.f32.gmra.mxu0 %v159
    %v180 = vpop.f32.mrf.mxu0
    %v181 = vadd.f32 0.0, %v180
    %182 = vdwg.mxu0
    %184 = vrot.lane.b32.xlu0 %v99, 96
    %v185 = vpop.permute.xlu0 %184
    %v186 = vsel %vm104, %v99, 0
    %v188 = vsel %vm104, %v185, 0
    %190 = vmatpush.xpose.msra.mxu0 0.0
    %191 = vmatpush.xpose.msra.mxu0 0.0
    %192 = vmatpush.xpose.msra.mxu0 0.0
    %193 = vmatpush.xpose.msra.mxu0 0.0
    %194 = vmatpush.xpose.msra.mxu0 0.0
    %195 = vmatpush.xpose.msra.mxu0 0.0
    %196 = vmatpush.xpose.msra.mxu0 0.0
    %197 = vmatpush.xpose.msra.mxu0 0.0
    %198 = vmatpush.xpose.msra.mxu0 0.0
    %199 = vmatpush.xpose.msra.mxu0 0.0
    %200 = vmatpush.xpose.msra.mxu0 0.0
    %201 = vmatpush.xpose.msra.mxu0 0.0
    %202 = vmatpush.xpose.msra.mxu0 0.0
    %203 = vmatpush.xpose.msra.mxu0 0.0
    %204 = vmatpush.xpose.msra.mxu0 0.0
    %205 = vmatpush.xpose.msra.mxu0 %v188
    %206 = vmatmul.f32.gmra.mxu0 %v186
    %v207 = vpop.f32.mrf.mxu0
    %v208 = vadd.f32 0.0, %v207
    %209 = vdwg.mxu0
    %vm210 = vcmask 64512
    %v211 = vsel %vm210, %v127, -inf
    %212 = vmax.xlane.f32.xlu0 %v211
    %v213 = vpop.xlane.xlu0 %212
    %v214 = vsel %vm210, %v154, -inf
    %215 = vmax.xlane.f32.xlu0 %v214
    %v216 = vpop.xlane.xlu0 %215
    %v217 = vsel %vm210, %v181, -inf
    %218 = vmax.xlane.f32.xlu0 %v217
    %v219 = vpop.xlane.xlu0 %218
    %v220 = vsel %vm210, %v208, -inf
    %221 = vmax.xlane.f32.xlu0 %v220
    %v222 = vpop.xlane.xlu0 %221
    %v223 = vsub.f32 %v127, %v213
    %v224 = vsub.f32 %v154, %v216
    %v225 = vsub.f32 %v181, %v219
    %v226 = vsub.f32 %v208, %v222
    %v227 = vmul.f32 %v223, 1.442695
    %v228 = vpow.pop %v227
    %v229 = vmul.f32 %v224, 1.442695
    %v230 = vpow.pop %v229
    %v231 = vmul.f32 %v225, 1.442695
    %v232 = vpow.pop %v231
    %v233 = vmul.f32 %v226, 1.442695
    %v234 = vpow.pop %v233
    %v235 = vsel %vm210, %v228, 0.0
    %236 = vadd.xlane.f32.xlu0 %v235
    %v237 = vpop.xlane.xlu0 %236
    %v238 = vsel %vm210, %v230, 0.0
    %239 = vadd.xlane.f32.xlu0 %v238
    %v240 = vpop.xlane.xlu0 %239
    %v241 = vsel %vm210, %v232, 0.0
    %242 = vadd.xlane.f32.xlu0 %v241
    %v243 = vpop.xlane.xlu0 %242
    %v244 = vsel %vm210, %v234, 0.0
    %245 = vadd.xlane.f32.xlu0 %v244
    %v246 = vpop.xlane.xlu0 %245
    %247 = vrot.lane.b32.xlu0 %v90, 64
    %v248 = vpop.permute.xlu0 %247
    %v251 = vsel %vm210, %v228, 0
    %253 = vmatpush.msra.mxu0 0.0
    %254 = vmatpush.msra.mxu0 0.0
    %255 = vmatpush.msra.mxu0 0.0
    %256 = vmatpush.msra.mxu0 0.0
    %257 = vmatpush.msra.mxu0 0.0
    %258 = vmatpush.msra.mxu0 0.0
    %259 = vmatpush.msra.mxu0 0.0
    %260 = vmatpush.msra.mxu0 0.0
    %261 = vmatpush.msra.mxu0 0.0
    %262 = vmatpush.msra.mxu0 0.0
    %263 = vmatpush.msra.mxu0 0.0
    %264 = vmatpush.msra.mxu0 0.0
    %265 = vmatpush.msra.mxu0 0.0
    %266 = vmatpush.msra.mxu0 0.0
    %267 = vmatpush.msra.mxu0 0.0
    %268 = vmatpush.msra.mxu0 %v248
    %269 = vmatmul.f32.gmra.mxu0 %v251
    %v270 = vpop.f32.mrf.mxu0
    %v271 = vadd.f32 0.0, %v270
    %272 = vdwg.mxu0
    %273 = vrot.lane.b32.xlu0 %v93, 64
    %v274 = vpop.permute.xlu0 %273
    %v277 = vsel %vm210, %v230, 0
    %279 = vmatpush.msra.mxu0 0.0
    %280 = vmatpush.msra.mxu0 0.0
    %281 = vmatpush.msra.mxu0 0.0
    %282 = vmatpush.msra.mxu0 0.0
    %283 = vmatpush.msra.mxu0 0.0
    %284 = vmatpush.msra.mxu0 0.0
    %285 = vmatpush.msra.mxu0 0.0
    %286 = vmatpush.msra.mxu0 0.0
    %287 = vmatpush.msra.mxu0 0.0
    %288 = vmatpush.msra.mxu0 0.0
    %289 = vmatpush.msra.mxu0 0.0
    %290 = vmatpush.msra.mxu0 0.0
    %291 = vmatpush.msra.mxu0 0.0
    %292 = vmatpush.msra.mxu0 0.0
    %293 = vmatpush.msra.mxu0 0.0
    %294 = vmatpush.msra.mxu0 %v274
    %295 = vmatmul.f32.gmra.mxu0 %v277
    %v296 = vpop.f32.mrf.mxu0
    %v297 = vadd.f32 0.0, %v296
    %298 = vdwg.mxu0
    %299 = vrot.lane.b32.xlu0 %v96, 64
    %v300 = vpop.permute.xlu0 %299
    %v303 = vsel %vm210, %v232, 0
    %305 = vmatpush.msra.mxu0 0.0
    %306 = vmatpush.msra.mxu0 0.0
    %307 = vmatpush.msra.mxu0 0.0
    %308 = vmatpush.msra.mxu0 0.0
    %309 = vmatpush.msra.mxu0 0.0
    %310 = vmatpush.msra.mxu0 0.0
    %311 = vmatpush.msra.mxu0 0.0
    %312 = vmatpush.msra.mxu0 0.0
    %313 = vmatpush.msra.mxu0 0.0
    %314 = vmatpush.msra.mxu0 0.0
    %315 = vmatpush.msra.mxu0 0.0
    %316 = vmatpush.msra.mxu0 0.0
    %317 = vmatpush.msra.mxu0 0.0
    %318 = vmatpush.msra.mxu0 0.0
    %319 = vmatpush.msra.mxu0 0.0
    %320 = vmatpush.msra.mxu0 %v300
    %321 = vmatmul.f32.gmra.mxu0 %v303
    %v322 = vpop.f32.mrf.mxu0
    %v323 = vadd.f32 0.0, %v322
    %324 = vdwg.mxu0
    %325 = vrot.lane.b32.xlu0 %v99, 64
    %v326 = vpop.permute.xlu0 %325
    %v329 = vsel %vm210, %v234, 0
    %331 = vmatpush.msra.mxu0 0.0
    %332 = vmatpush.msra.mxu0 0.0
    %333 = vmatpush.msra.mxu0 0.0
    %334 = vmatpush.msra.mxu0 0.0
    %335 = vmatpush.msra.mxu0 0.0
    %336 = vmatpush.msra.mxu0 0.0
    %337 = vmatpush.msra.mxu0 0.0
    %338 = vmatpush.msra.mxu0 0.0
    %339 = vmatpush.msra.mxu0 0.0
    %340 = vmatpush.msra.mxu0 0.0
    %341 = vmatpush.msra.mxu0 0.0
    %342 = vmatpush.msra.mxu0 0.0
    %343 = vmatpush.msra.mxu0 0.0
    %344 = vmatpush.msra.mxu0 0.0
    %345 = vmatpush.msra.mxu0 0.0
    %346 = vmatpush.msra.mxu0 %v326
    %347 = vmatmul.f32.gmra.mxu0 %v329
    %v348 = vpop.f32.mrf.mxu0
    %v349 = vadd.f32 0.0, %v348
    %350 = vdwg.mxu0
    %v351 = vrcp.pop %v237
    %v352 = vrcp.pop %v240
    %v353 = vrcp.pop %v243
    %v354 = vrcp.pop %v246
    %v355 = vmul.f32 %v271, %v351
    %v356 = vmul.f32 %v297, %v352
    %v357 = vmul.f32 %v323, %v353
    %v358 = vmul.f32 %v349, %v354
    %359 = vrot.lane.b32.xlu0 %v90, 112
    %v360 = vpop.permute.xlu0 %359
    %361 = vrot.lane.b32.xlu0 %v90, 80
    %v362 = vpop.permute.xlu0 %361
    %v363 = vsel %vm104, %v360, 0
    %v365 = vsel %vm104, %v362, 0
    %367 = vmatpush.xpose.msra.mxu0 0.0
    %368 = vmatpush.xpose.msra.mxu0 0.0
    %369 = vmatpush.xpose.msra.mxu0 0.0
    %370 = vmatpush.xpose.msra.mxu0 0.0
    %371 = vmatpush.xpose.msra.mxu0 0.0
    %372 = vmatpush.xpose.msra.mxu0 0.0
    %373 = vmatpush.xpose.msra.mxu0 0.0
    %374 = vmatpush.xpose.msra.mxu0 0.0
    %375 = vmatpush.xpose.msra.mxu0 0.0
    %376 = vmatpush.xpose.msra.mxu0 0.0
    %377 = vmatpush.xpose.msra.mxu0 0.0
    %378 = vmatpush.xpose.msra.mxu0 0.0
    %379 = vmatpush.xpose.msra.mxu0 0.0
    %380 = vmatpush.xpose.msra.mxu0 0.0
    %381 = vmatpush.xpose.msra.mxu0 0.0
    %382 = vmatpush.xpose.msra.mxu0 %v365
    %383 = vmatmul.f32.gmra.mxu0 %v363
    %v384 = vpop.f32.mrf.mxu0
    %v385 = vadd.f32 0.0, %v384
    %386 = vdwg.mxu0
    %387 = vrot.lane.b32.xlu0 %v93, 112
    %v388 = vpop.permute.xlu0 %387
    %389 = vrot.lane.b32.xlu0 %v93, 80
    %v390 = vpop.permute.xlu0 %389
    %v391 = vsel %vm104, %v388, 0
    %v393 = vsel %vm104, %v390, 0
    %395 = vmatpush.xpose.msra.mxu0 0.0
    %396 = vmatpush.xpose.msra.mxu0 0.0
    %397 = vmatpush.xpose.msra.mxu0 0.0
    %398 = vmatpush.xpose.msra.mxu0 0.0
    %399 = vmatpush.xpose.msra.mxu0 0.0
    %400 = vmatpush.xpose.msra.mxu0 0.0
    %401 = vmatpush.xpose.msra.mxu0 0.0
    %402 = vmatpush.xpose.msra.mxu0 0.0
    %403 = vmatpush.xpose.msra.mxu0 0.0
    %404 = vmatpush.xpose.msra.mxu0 0.0
    %405 = vmatpush.xpose.msra.mxu0 0.0
    %406 = vmatpush.xpose.msra.mxu0 0.0
    %407 = vmatpush.xpose.msra.mxu0 0.0
    %408 = vmatpush.xpose.msra.mxu0 0.0
    %409 = vmatpush.xpose.msra.mxu0 0.0
    %410 = vmatpush.xpose.msra.mxu0 %v393
    %411 = vmatmul.f32.gmra.mxu0 %v391
    %v412 = vpop.f32.mrf.mxu0
    %v413 = vadd.f32 0.0, %v412
    %414 = vdwg.mxu0
    %415 = vrot.lane.b32.xlu0 %v96, 112
    %v416 = vpop.permute.xlu0 %415
    %417 = vrot.lane.b32.xlu0 %v96, 80
    %v418 = vpop.permute.xlu0 %417
    %v419 = vsel %vm104, %v416, 0
    %v421 = vsel %vm104, %v418, 0
    %423 = vmatpush.xpose.msra.mxu0 0.0
    %424 = vmatpush.xpose.msra.mxu0 0.0
    %425 = vmatpush.xpose.msra.mxu0 0.0
    %426 = vmatpush.xpose.msra.mxu0 0.0
    %427 = vmatpush.xpose.msra.mxu0 0.0
    %428 = vmatpush.xpose.msra.mxu0 0.0
    %429 = vmatpush.xpose.msra.mxu0 0.0
    %430 = vmatpush.xpose.msra.mxu0 0.0
    %431 = vmatpush.xpose.msra.mxu0 0.0
    %432 = vmatpush.xpose.msra.mxu0 0.0
    %433 = vmatpush.xpose.msra.mxu0 0.0
    %434 = vmatpush.xpose.msra.mxu0 0.0
    %435 = vmatpush.xpose.msra.mxu0 0.0
    %436 = vmatpush.xpose.msra.mxu0 0.0
    %437 = vmatpush.xpose.msra.mxu0 0.0
    %438 = vmatpush.xpose.msra.mxu0 %v421
    %439 = vmatmul.f32.gmra.mxu0 %v419
    %v440 = vpop.f32.mrf.mxu0
    %v441 = vadd.f32 0.0, %v440
    %442 = vdwg.mxu0
    %443 = vrot.lane.b32.xlu0 %v99, 112
    %v444 = vpop.permute.xlu0 %443
    %445 = vrot.lane.b32.xlu0 %v99, 80
    %v446 = vpop.permute.xlu0 %445
    %v447 = vsel %vm104, %v444, 0
    %v449 = vsel %vm104, %v446, 0
    %451 = vmatpush.xpose.msra.mxu0 0.0
    %452 = vmatpush.xpose.msra.mxu0 0.0
    %453 = vmatpush.xpose.msra.mxu0 0.0
    %454 = vmatpush.xpose.msra.mxu0 0.0
    %455 = vmatpush.xpose.msra.mxu0 0.0
    %456 = vmatpush.xpose.msra.mxu0 0.0
    %457 = vmatpush.xpose.msra.mxu0 0.0
    %458 = vmatpush.xpose.msra.mxu0 0.0
    %459 = vmatpush.xpose.msra.mxu0 0.0
    %460 = vmatpush.xpose.msra.mxu0 0.0
    %461 = vmatpush.xpose.msra.mxu0 0.0
    %462 = vmatpush.xpose.msra.mxu0 0.0
    %463 = vmatpush.xpose.msra.mxu0 0.0
    %464 = vmatpush.xpose.msra.mxu0 0.0
    %465 = vmatpush.xpose.msra.mxu0 0.0
    %466 = vmatpush.xpose.msra.mxu0 %v449
    %467 = vmatmul.f32.gmra.mxu0 %v447
    %v468 = vpop.f32.mrf.mxu0
    %v469 = vadd.f32 0.0, %v468
    %470 = vdwg.mxu0
    %v471 = vsel %vm210, %v385, -inf
    %472 = vmax.xlane.f32.xlu0 %v471
    %v473 = vpop.xlane.xlu0 %472
    %v474 = vsel %vm210, %v413, -inf
    %475 = vmax.xlane.f32.xlu0 %v474
    %v476 = vpop.xlane.xlu0 %475
    %v477 = vsel %vm210, %v441, -inf
    %478 = vmax.xlane.f32.xlu0 %v477
    %v479 = vpop.xlane.xlu0 %478
    %v480 = vsel %vm210, %v469, -inf
    %481 = vmax.xlane.f32.xlu0 %v480
    %v482 = vpop.xlane.xlu0 %481
    %v483 = vsub.f32 %v385, %v473
    %v484 = vsub.f32 %v413, %v476
    %v485 = vsub.f32 %v441, %v479
    %v486 = vsub.f32 %v469, %v482
    %v487 = vmul.f32 %v483, 1.442695
    %v488 = vpow.pop %v487
    %v489 = vmul.f32 %v484, 1.442695
    %v490 = vpow.pop %v489
    %v491 = vmul.f32 %v485, 1.442695
    %v492 = vpow.pop %v491
    %v493 = vmul.f32 %v486, 1.442695
    %v494 = vpow.pop %v493
    %v495 = vsel %vm210, %v488, 0.0
    %496 = vadd.xlane.f32.xlu0 %v495
    %v497 = vpop.xlane.xlu0 %496
    %v498 = vsel %vm210, %v490, 0.0
    %499 = vadd.xlane.f32.xlu0 %v498
    %v500 = vpop.xlane.xlu0 %499
    %v501 = vsel %vm210, %v492, 0.0
    %502 = vadd.xlane.f32.xlu0 %v501
    %v503 = vpop.xlane.xlu0 %502
    %v504 = vsel %vm210, %v494, 0.0
    %505 = vadd.xlane.f32.xlu0 %v504
    %v506 = vpop.xlane.xlu0 %505
    %507 = vrot.lane.b32.xlu0 %v90, 48
    %v508 = vpop.permute.xlu0 %507
    %v511 = vsel %vm210, %v488, 0
    %513 = vmatpush.msra.mxu0 0.0
    %514 = vmatpush.msra.mxu0 0.0
    %515 = vmatpush.msra.mxu0 0.0
    %516 = vmatpush.msra.mxu0 0.0
    %517 = vmatpush.msra.mxu0 0.0
    %518 = vmatpush.msra.mxu0 0.0
    %519 = vmatpush.msra.mxu0 0.0
    %520 = vmatpush.msra.mxu0 0.0
    %521 = vmatpush.msra.mxu0 0.0
    %522 = vmatpush.msra.mxu0 0.0
    %523 = vmatpush.msra.mxu0 0.0
    %524 = vmatpush.msra.mxu0 0.0
    %525 = vmatpush.msra.mxu0 0.0
    %526 = vmatpush.msra.mxu0 0.0
    %527 = vmatpush.msra.mxu0 0.0
    %528 = vmatpush.msra.mxu0 %v508
    %529 = vmatmul.f32.gmra.mxu0 %v511
    %v530 = vpop.f32.mrf.mxu0
    %v531 = vadd.f32 0.0, %v530
    %532 = vdwg.mxu0
    %533 = vrot.lane.b32.xlu0 %v93, 48
    %v534 = vpop.permute.xlu0 %533
    %v537 = vsel %vm210, %v490, 0
    %539 = vmatpush.msra.mxu0 0.0
    %540 = vmatpush.msra.mxu0 0.0
    %541 = vmatpush.msra.mxu0 0.0
    %542 = vmatpush.msra.mxu0 0.0
    %543 = vmatpush.msra.mxu0 0.0
    %544 = vmatpush.msra.mxu0 0.0
    %545 = vmatpush.msra.mxu0 0.0
    %546 = vmatpush.msra.mxu0 0.0
    %547 = vmatpush.msra.mxu0 0.0
    %548 = vmatpush.msra.mxu0 0.0
    %549 = vmatpush.msra.mxu0 0.0
    %550 = vmatpush.msra.mxu0 0.0
    %551 = vmatpush.msra.mxu0 0.0
    %552 = vmatpush.msra.mxu0 0.0
    %553 = vmatpush.msra.mxu0 0.0
    %554 = vmatpush.msra.mxu0 %v534
    %555 = vmatmul.f32.gmra.mxu0 %v537
    %v556 = vpop.f32.mrf.mxu0
    %v557 = vadd.f32 0.0, %v556
    %558 = vdwg.mxu0
    %559 = vrot.lane.b32.xlu0 %v96, 48
    %v560 = vpop.permute.xlu0 %559
    %v563 = vsel %vm210, %v492, 0
    %565 = vmatpush.msra.mxu0 0.0
    %566 = vmatpush.msra.mxu0 0.0
    %567 = vmatpush.msra.mxu0 0.0
    %568 = vmatpush.msra.mxu0 0.0
    %569 = vmatpush.msra.mxu0 0.0
    %570 = vmatpush.msra.mxu0 0.0
    %571 = vmatpush.msra.mxu0 0.0
    %572 = vmatpush.msra.mxu0 0.0
    %573 = vmatpush.msra.mxu0 0.0
    %574 = vmatpush.msra.mxu0 0.0
    %575 = vmatpush.msra.mxu0 0.0
    %576 = vmatpush.msra.mxu0 0.0
    %577 = vmatpush.msra.mxu0 0.0
    %578 = vmatpush.msra.mxu0 0.0
    %579 = vmatpush.msra.mxu0 0.0
    %580 = vmatpush.msra.mxu0 %v560
    %581 = vmatmul.f32.gmra.mxu0 %v563
    %v582 = vpop.f32.mrf.mxu0
    %v583 = vadd.f32 0.0, %v582
    %584 = vdwg.mxu0
    %585 = vrot.lane.b32.xlu0 %v99, 48
    %v586 = vpop.permute.xlu0 %585
    %v589 = vsel %vm210, %v494, 0
    %591 = vmatpush.msra.mxu0 0.0
    %592 = vmatpush.msra.mxu0 0.0
    %593 = vmatpush.msra.mxu0 0.0
    %594 = vmatpush.msra.mxu0 0.0
    %595 = vmatpush.msra.mxu0 0.0
    %596 = vmatpush.msra.mxu0 0.0
    %597 = vmatpush.msra.mxu0 0.0
    %598 = vmatpush.msra.mxu0 0.0
    %599 = vmatpush.msra.mxu0 0.0
    %600 = vmatpush.msra.mxu0 0.0
    %601 = vmatpush.msra.mxu0 0.0
    %602 = vmatpush.msra.mxu0 0.0
    %603 = vmatpush.msra.mxu0 0.0
    %604 = vmatpush.msra.mxu0 0.0
    %605 = vmatpush.msra.mxu0 0.0
    %606 = vmatpush.msra.mxu0 %v586
    %607 = vmatmul.f32.gmra.mxu0 %v589
    %v608 = vpop.f32.mrf.mxu0
    %v609 = vadd.f32 0.0, %v608
    %610 = vdwg.mxu0
    %v611 = vrcp.pop %v497
    %v612 = vrcp.pop %v500
    %v613 = vrcp.pop %v503
    %v614 = vrcp.pop %v506
    %v615 = vmul.f32 %v531, %v611
    %v616 = vmul.f32 %v557, %v612
    %v617 = vmul.f32 %v583, %v613
    %v618 = vmul.f32 %v609, %v614
    %623 = vrot.lane.b32.xlu0 %v615, 16
    %v624 = vpop.permute.xlu0 %623
    %625 = vrot.lane.b32.xlu0 %v616, 16
    %v626 = vpop.permute.xlu0 %625
    %627 = vrot.lane.b32.xlu0 %v617, 16
    %v628 = vpop.permute.xlu0 %627
    %629 = vrot.lane.b32.xlu0 %v618, 16
    %v630 = vpop.permute.xlu0 %629
    %v635 = vsel %vm104, %v355, %v624
    %v636 = vsel %vm104, %v356, %v626
    %v637 = vsel %vm104, %v357, %v628
    %v638 = vsel %vm104, %v358, %v630
    %639 = vst.msk [vmem:[#allocation7] sm:$0xff] %vm59, %v635
    %640 = vst.msk [vmem:[#allocation7 + $0x8] sm:$0xff] %vm59, %v636
    %641 = vst.msk [vmem:[#allocation7 + $0x10] sm:$0xff] %vm59, %v637
    %642 = vst.msk [vmem:[#allocation7 + $0x18] sm:$0xff] %vm59, %v638
    // Predicated region
    $region22: #{attention_module.1} parent=1 // pred_check
      _
    $region23: #{attention_module.1} parent=1 // pred_check_branch
      %644 = sbr.rel (0) target = $region25
    $region24: #{attention_module.1} parent=1 // pred_region
      %646 = vsyncadd [#allocation4], 0
      %s647 = sshll.u32 [#allocation7], 4
      %s648 = int_to_ptr.vmem [resolvable:$true] %s647
      %s649 = sshll.u32 %s3, 4
      %s650 = int_to_ptr.hbm [resolvable:$true] %s649
      %655 = dma.vmem_to_hbm [thread:$0]  %s648, 512, %s650, [#allocation4], 128, 128, 8
    $region25: #{attention_module.1} parent=1 // pred_fallthru
      _
    // Predicated region
    $region26: #{attention_module.1} parent=1 // pred_check
      _
    $region27: #{attention_module.1} parent=1 // pred_check_branch
      %657 = sbr.rel (0) target = $region29
    $region28: #{attention_module.1} parent=1 // pred_region
      %659 = dma.done [#allocation4], 512
    $region29: #{attention_module.1} parent=1 // pred_fallthru
      _
    %660 = vsyncpa [#allocation3], 1
    %661 = vsyncpa [#allocation6], 1
    %662 = vsyncpa [#allocation4], 1

</llo_original>
